<compile_context>
chip_gen: v7x
topology: tpu7x:2x2x1
jax: 0.10.0
libtpu: 0.0.40
codegen_flags: <defaults>
</compile_context>

<pallas_src>
import functools
import math

import jax
import jax.numpy as jnp
from jax.experimental import pallas as pl
from jax.experimental.pallas import tpu as pltpu


_LANE = 128      # lane width (last axis)
_SUBLANE = 8     # sublane width (second-to-last axis)


def _round_up(n, m):
    return ((n + m - 1) // m) * m


def _pad2d(x, rows, cols):
    return jnp.pad(x, ((0, rows - x.shape[0]), (0, cols - x.shape[1])))


# ----------------------------------------------------------------------------
# Pallas kernel: the whole DQN2 forward in ONE pallas_call
# ----------------------------------------------------------------------------
def _fused_mlp_kernel(*refs, op_kinds):
    """refs = (x_ref, w0, b0, w1, b1, ..., o_ref).

    op_kinds is a static tuple of "M" (matmul + bias, consumes one (w, b) ref
    pair) or "R" (ReLU).  Intermediate activations live in vregs/VMEM for the
    whole chain; only x and the final output touch HBM.
    """
    x_ref = refs[0]
    o_ref = refs[-1]
    h = x_ref[...]                                  # f32 activations
    wi = 1
    for kind in op_kinds:
        if kind == "R":
            h = jnp.maximum(h, 0.0)                 # VPU, f32 (v5e-safe)
        else:  # "M": y = h @ W + b
            w = refs[wi][...]
            b = refs[wi + 1][0:1, :]                # row 0 of the (8, N) bias
            wi += 2
            # MXU matmul in the weight dtype (bf16 by default) with f32
            # accumulation; bias add stays f32 on the VPU.
            h = jnp.dot(h.astype(w.dtype), w,
                        preferred_element_type=jnp.float32) + b
    o_ref[...] = h.astype(o_ref.dtype)


# ----------------------------------------------------------------------------
# Deterministic parameter construction (mirrors PyTorch module __init__)
# ----------------------------------------------------------------------------
def _init_linear(key, n_in, n_out):
    k_w, k_b = jax.random.split(key)
    bound = 1.0 / math.sqrt(n_in)
    return {
        "type": "L",
        # stored pre-transposed to (in, out)
        "w": jax.random.uniform(k_w, (n_in, n_out), jnp.float32, -bound, bound),
        "b": jax.random.uniform(k_b, (n_out,), jnp.float32, -bound, bound),
    }


def _factorized_noise(key, size):
    x = jax.random.normal(key, (size,), jnp.float32)
    return jnp.sign(x) * jnp.sqrt(jnp.abs(x))


def _init_noisy(key, n_in, n_out, std_init=0.5):
    k_wm, k_bm, k_ein, k_eout = jax.random.split(key, 4)
    mu_range = 1.0 / math.sqrt(n_in)
    eps_in = _factorized_noise(k_ein, n_in)
    eps_out = _factorized_noise(k_eout, n_out)
    return {
        "type": "NL",
        # stored pre-transposed to (in, out); eps = outer(eps_in, eps_out)
        "w_mu": jax.random.uniform(k_wm, (n_in, n_out), jnp.float32,
                                   -mu_range, mu_range),
        "w_sigma": jnp.full((n_in, n_out), std_init * mu_range, jnp.float32),
        "w_eps": jnp.outer(eps_in, eps_out),
        "b_mu": jax.random.uniform(k_bm, (n_out,), jnp.float32,
                                   -mu_range, mu_range),
        "b_sigma": jnp.full((n_out,), std_init / math.sqrt(n_out), jnp.float32),
        "b_eps": eps_out,
    }


def build_dqn2_params(key, num_inputs, num_outputs, arch):
    """Mirrors build_sequential_layers + trailing Linear(prev, num_outputs)."""
    layers = []
    prev = num_inputs
    for a in arch:
        if isinstance(a, int):
            k, v = "L", a
        else:
            k, v = a
        if k == "L":
            key, sub = jax.random.split(key)
            layers.append(_init_linear(sub, prev, v))
        elif k == "NL":
            key, sub = jax.random.split(key)
            layers.append(_init_noisy(sub, prev, v))
        elif k == "R":
            layers.append({"type": "R"})
        else:
            raise ValueError("Invalid entry", k)
        prev = v  # faithful to reference (prev = value even for 'R')
    key, sub = jax.random.split(key)
    layers.append(_init_linear(sub, prev, num_outputs))
    return layers


# ----------------------------------------------------------------------------
# Inference-time preparation (run once per noise resample)
# ----------------------------------------------------------------------------
def prepare_forward_params(params, weight_dtype=jnp.bfloat16):
    """Fold NoisyLayer noise into effective weights; cast / pad once.

    * Effective weights (mu + sigma * eps) are a plain jnp combine — a 64x64
      elementwise op does not justify a kernel launch.  Rerun this after
      every noise resample.
    * Weights keep their TRUE shapes; only the final layer's output dim is
      padded to 128 lanes (lane-dense HBM output store).  Hidden activations
      never leave VMEM, so their widths need no padding.
    * weight_dtype=bf16 halves weight DMA and uses the native bf16 MXU path;
      use jnp.float32 if exact f32 weights are required.
    * Biases are padded to 8 sublanes (kernel reads row 0) and stay f32.
    """
    op_kinds = []
    mats = []  # (w, b) pairs in true shapes, f32
    for layer in params:
        t = layer["type"]
        if t == "R":
            op_kinds.append("R")
            continue
        if t == "L":
            w, b = layer["w"], layer["b"]
        else:  # "NL": fold noise into effective weights (off the hot path)
            w = layer["w_mu"] + layer["w_sigma"] * layer["w_eps"]
            b = layer["b_mu"] + layer["b_sigma"] * layer["b_eps"]
        mats.append((w, b))
        op_kinds.append("M")

    first_in = mats[0][0].shape[0]
    last_out = mats[-1][0].shape[1]
    out_pad = _round_up(last_out, _LANE)

    tensors = []
    for li, (w, b) in enumerate(mats):
        n_in, n_out = w.shape
        n_out_p = out_pad if li == len(mats) - 1 else n_out
        tensors.append(_pad2d(w, n_in, n_out_p).astype(weight_dtype))
        tensors.append(_pad2d(b.reshape(1, n_out), _SUBLANE, n_out_p))

    return {
        "op_kinds": tuple(op_kinds),
        "tensors": tensors,
        "in_features": first_in,
        "out_features": last_out,
        "out_pad": out_pad,
    }


# ----------------------------------------------------------------------------
# Fused forward
# ----------------------------------------------------------------------------
def dqn2_forward(prep, x):
    """Single fused pallas_call for the whole forward pass."""
    B, F = x.shape
    assert F == prep["in_features"], (F, prep["in_features"])
    out_pad = prep["out_pad"]

    # Batch tiling:
    #   * tiny batches -> one (>=8)-row block (pure launch/weight-DMA bound)
    #   * otherwise    -> tiles of up to 512 rows (per-step overhead amortized,
    #     ~roofline plateau) and always >= 2 blocks so the "parallel" grid
    #     axis shards across both TensorCores on v7x.
    B8 = _round_up(B, _SUBLANE)
    if B8 <= 4 * _SUBLANE:
        TB = B8
    else:
        TB = min(512, _round_up((B8 + 1) // 2, _SUBLANE))
    B_pad = _round_up(B8, TB)
    grid = (B_pad // TB,)

    # Only the batch axis is padded; the feature axis keeps its true width
    # (block last dim == full array dim is legal -> no 4x input inflation).
    x_pad = jnp.pad(x, ((0, B_pad - B), (0, 0)))

    in_specs = [pl.BlockSpec((TB, F), lambda i: (i, 0))]
    for t in prep["tensors"]:
        # Whole-array, VMEM-resident across the batch grid (constant block
        # index -> fetched once, not re-DMA'd per step).  Total weight bytes
        # are tiny, so VMEM headroom is ample even at TB=512.
        in_specs.append(pl.BlockSpec(t.shape, lambda i: (0, 0)))
    out_spec = pl.BlockSpec((TB, out_pad), lambda i: (i, 0))

    y_pad = pl.pallas_call(
        functools.partial(_fused_mlp_kernel, op_kinds=prep["op_kinds"]),
        out_shape=jax.ShapeDtypeStruct((B_pad, out_pad), jnp.float32),
        grid=grid,
        in_specs=in_specs,
        out_specs=out_spec,
        compiler_params=pltpu.CompilerParams(
            dimension_semantics=("parallel",)),
    )(x_pad, *prep["tensors"])

    return y_pad[:B, :prep["out_features"]]


# ----------------------------------------------------------------------------
# Pure-JAX reference (for sanity check)
# ----------------------------------------------------------------------------
def dqn2_forward_ref(params, x):
    h = x
    for layer in params:
        t = layer["type"]
        if t == "R":
            h = jnp.maximum(h, 0.0)
        elif t == "L":
            h = jnp.dot(h, layer["w"], precision=jax.lax.Precision.HIGHEST)
            h = h + layer["b"]
        else:
            w = layer["w_mu"] + layer["w_sigma"] * layer["w_eps"]
            b = layer["b_mu"] + layer["b_sigma"] * layer["b_eps"]
            h = jnp.dot(h, w, precision=jax.lax.Precision.HIGHEST) + b
    return h


# ----------------------------------------------------------------------------
if __name__ == "__main__":
    num_inputs = 32     # state-space size
    num_outputs = 8     # action-space size
    # arch: Linear(32->64), ReLU, NoisyLayer(64->64), ReLU, final Linear(64->8)
    arch = [("L", 64), ("R", 64), ("NL", 64), ("R", 64)]

    key = jax.random.PRNGKey(0)
    k_params, k_x1, k_x2 = jax.random.split(key, 3)

    params = build_dqn2_params(k_params, num_inputs, num_outputs, arch)
    prep_f32 = prepare_forward_params(params, weight_dtype=jnp.float32)
    prep_bf16 = prepare_forward_params(params, weight_dtype=jnp.bfloat16)

    # small inference-style batch (single-block path) and a larger batch that
    # exercises the multi-block "parallel" grid path + batch padding.
    x_small = jax.random.normal(k_x1, (2, num_inputs), jnp.float32)
    x_large = jax.random.normal(k_x2, (300, num_inputs), jnp.float32)

    for x in (x_small, x_large):
        ref = dqn2_forward_ref(params, x)

        out = dqn2_forward(prep_f32, x)
        jax.block_until_ready(out)
        assert out.shape == (x.shape[0], num_outputs), out.shape
        assert out.dtype == jnp.float32
        assert jnp.allclose(out, ref, atol=1e-3, rtol=1e-3), (
            float(jnp.max(jnp.abs(out - ref))))

        out_bf16 = dqn2_forward(prep_bf16, x)
        jax.block_until_ready(out_bf16)
        assert out_bf16.shape == (x.shape[0], num_outputs), out_bf16.shape
        # bf16 weights/matmul inputs -> wider (but still tight) tolerance.
        assert jnp.allclose(out_bf16, ref, atol=5e-2, rtol=5e-2), (
            float(jnp.max(jnp.abs(out_bf16 - ref))))

    print("KERNEL_OK")
</pallas_src>

<mosaic_0001>
module attributes {stable_mosaic.version = 11 : i64} {
  func.func @_fused_mlp_kernel(%arg0: i32, %arg1: memref<8x32xf32, #tpu.memory_space<vmem>>, %arg2: memref<32x64xf32, #tpu.memory_space<vmem>>, %arg3: memref<8x64xf32, #tpu.memory_space<vmem>>, %arg4: memref<64x64xf32, #tpu.memory_space<vmem>>, %arg5: memref<8x64xf32, #tpu.memory_space<vmem>>, %arg6: memref<64x128xf32, #tpu.memory_space<vmem>>, %arg7: memref<8x128xf32, #tpu.memory_space<vmem>>, %arg8: memref<8x128xf32, #tpu.memory_space<vmem>>) attributes {dimension_semantics = [#tpu.dimension_semantics<parallel>], iteration_bounds = array<i64: 1>, scalar_prefetch = 0 : i64, scratch_operands = 0 : i64, tpu.core_type = #tpu.core_type<tc>, window_params = [{transform_indices = @transform_0, window_bounds = array<i64: 8, 32>}, {pipeline_mode = #tpu.pipeline_mode<synchronous>, transform_indices = @transform_1, window_bounds = array<i64: 32, 64>}, {pipeline_mode = #tpu.pipeline_mode<synchronous>, transform_indices = @transform_2, window_bounds = array<i64: 8, 64>}, {pipeline_mode = #tpu.pipeline_mode<synchronous>, transform_indices = @transform_3, window_bounds = array<i64: 64, 64>}, {pipeline_mode = #tpu.pipeline_mode<synchronous>, transform_indices = @transform_4, window_bounds = array<i64: 8, 64>}, {pipeline_mode = #tpu.pipeline_mode<synchronous>, transform_indices = @transform_5, window_bounds = array<i64: 64, 128>}, {pipeline_mode = #tpu.pipeline_mode<synchronous>, transform_indices = @transform_6, window_bounds = array<i64: 8, 128>}, {transform_indices = @transform_7, window_bounds = array<i64: 8, 128>}]} {
    %c0 = arith.constant 0 : index
    %c0_0 = arith.constant 0 : index
    %0 = vector.load %arg1[%c0, %c0_0] : memref<8x32xf32, #tpu.memory_space<vmem>>, vector<8x32xf32>
    %c0_1 = arith.constant 0 : index
    %c0_2 = arith.constant 0 : index
    %1 = vector.load %arg2[%c0_1, %c0_2] : memref<32x64xf32, #tpu.memory_space<vmem>>, vector<32x64xf32>
    %c0_3 = arith.constant 0 : index
    %c0_4 = arith.constant 0 : index
    %2 = vector.load %arg3[%c0_3, %c0_4] : memref<8x64xf32, #tpu.memory_space<vmem>>, vector<1x64xf32>
    %cst = arith.constant dense<0.000000e+00> : vector<8x64xf32>
    %3 = tpu.matmul %0, %1, %cst {dimension_numbers = #tpu.dot_dimension_numbers<[1], [0], [0], [1], [0, 0, 1, 1], [], []>} : vector<8x32xf32>, vector<32x64xf32>, vector<8x64xf32> -> vector<8x64xf32>
    %4 = vector.broadcast %2 : vector<1x64xf32> to vector<8x64xf32>
    %5 = arith.addf %3, %4 : vector<8x64xf32>
    %cst_5 = arith.constant 0.000000e+00 : f32
    %6 = vector.broadcast %cst_5 : f32 to vector<8x64xf32>
    %7 = arith.maximumf %5, %6 : vector<8x64xf32>
    %c0_6 = arith.constant 0 : index
    %c0_7 = arith.constant 0 : index
    %8 = vector.load %arg4[%c0_6, %c0_7] : memref<64x64xf32, #tpu.memory_space<vmem>>, vector<64x64xf32>
    %c0_8 = arith.constant 0 : index
    %c0_9 = arith.constant 0 : index
    %9 = vector.load %arg5[%c0_8, %c0_9] : memref<8x64xf32, #tpu.memory_space<vmem>>, vector<1x64xf32>
    %cst_10 = arith.constant dense<0.000000e+00> : vector<8x64xf32>
    %10 = tpu.matmul %7, %8, %cst_10 {dimension_numbers = #tpu.dot_dimension_numbers<[1], [0], [0], [1], [0, 0, 1, 1], [], []>} : vector<8x64xf32>, vector<64x64xf32>, vector<8x64xf32> -> vector<8x64xf32>
    %11 = vector.broadcast %9 : vector<1x64xf32> to vector<8x64xf32>
    %12 = arith.addf %10, %11 : vector<8x64xf32>
    %cst_11 = arith.constant 0.000000e+00 : f32
    %13 = vector.broadcast %cst_11 : f32 to vector<8x64xf32>
    %14 = arith.maximumf %12, %13 : vector<8x64xf32>
    %c0_12 = arith.constant 0 : index
    %c0_13 = arith.constant 0 : index
    %15 = vector.load %arg6[%c0_12, %c0_13] : memref<64x128xf32, #tpu.memory_space<vmem>>, vector<64x128xf32>
    %c0_14 = arith.constant 0 : index
    %c0_15 = arith.constant 0 : index
    %16 = vector.load %arg7[%c0_14, %c0_15] : memref<8x128xf32, #tpu.memory_space<vmem>>, vector<1x128xf32>
    %cst_16 = arith.constant dense<0.000000e+00> : vector<8x128xf32>
    %17 = tpu.matmul %14, %15, %cst_16 {dimension_numbers = #tpu.dot_dimension_numbers<[1], [0], [0], [1], [0, 0, 1, 1], [], []>} : vector<8x64xf32>, vector<64x128xf32>, vector<8x128xf32> -> vector<8x128xf32>
    %18 = vector.broadcast %16 : vector<1x128xf32> to vector<8x128xf32>
    %19 = arith.addf %17, %18 : vector<8x128xf32>
    %c0_17 = arith.constant 0 : index
    %c0_18 = arith.constant 0 : index
    %20 = vector.load %arg8[%c0_17, %c0_18] : memref<8x128xf32, #tpu.memory_space<vmem>>, vector<8x128xf32>
    tpu.vector_store %arg8[%c0_17, %c0_18], %19 {strides = array<i32>} : memref<8x128xf32, #tpu.memory_space<vmem>>, vector<8x128xf32>,
    return
  }
  func.func @transform_0(%arg0: i32) -> (i32, i32) {
    %c0_i32 = arith.constant 0 : i32
    %c0_i32_0 = arith.constant 0 : i32
    return %arg0, %c0_i32 : i32, i32
  }
  func.func @transform_1(%arg0: i32) -> (i32, i32) {
    %c0_i32 = arith.constant 0 : i32
    %c0_i32_0 = arith.constant 0 : i32
    %c0_i32_1 = arith.constant 0 : i32
    return %c0_i32, %c0_i32_0 : i32, i32
  }
  func.func @transform_2(%arg0: i32) -> (i32, i32) {
    %c0_i32 = arith.constant 0 : i32
    %c0_i32_0 = arith.constant 0 : i32
    %c0_i32_1 = arith.constant 0 : i32
    return %c0_i32, %c0_i32_0 : i32, i32
  }
  func.func @transform_3(%arg0: i32) -> (i32, i32) {
    %c0_i32 = arith.constant 0 : i32
    %c0_i32_0 = arith.constant 0 : i32
    %c0_i32_1 = arith.constant 0 : i32
    return %c0_i32, %c0_i32_0 : i32, i32
  }
  func.func @transform_4(%arg0: i32) -> (i32, i32) {
    %c0_i32 = arith.constant 0 : i32
    %c0_i32_0 = arith.constant 0 : i32
    %c0_i32_1 = arith.constant 0 : i32
    return %c0_i32, %c0_i32_0 : i32, i32
  }
  func.func @transform_5(%arg0: i32) -> (i32, i32) {
    %c0_i32 = arith.constant 0 : i32
    %c0_i32_0 = arith.constant 0 : i32
    %c0_i32_1 = arith.constant 0 : i32
    return %c0_i32, %c0_i32_0 : i32, i32
  }
  func.func @transform_6(%arg0: i32) -> (i32, i32) {
    %c0_i32 = arith.constant 0 : i32
    %c0_i32_0 = arith.constant 0 : i32
    %c0_i32_1 = arith.constant 0 : i32
    return %c0_i32, %c0_i32_0 : i32, i32
  }
  func.func @transform_7(%arg0: i32) -> (i32, i32) {
    %c0_i32 = arith.constant 0 : i32
    %c0_i32_0 = arith.constant 0 : i32
    return %arg0, %c0_i32 : i32, i32
  }
}

</mosaic_0001>

<llo_original>
// kernel: tpu_custom_call.1
$region0: #{tpu_custom_call.1}
  #allocation0 [shape = 'u32[]', space=smem, size = 0x4, offset = 0x4, fixed_abs, tag = 'smem constant byte address 0x4 - core index']
  #allocation1 [shape = 'u32[144,128]{1,0:T(1,128)}', space=vmem, size = 0x12000, scoped, tag = 'internal scratch']
  %s0 = inlined_call_operand.hbm [shape: f32[8,32], index: 0, kind: input, shape index: {}]
  %s1 = inlined_call_operand.hbm [shape: f32[32,64], index: 1, kind: input, shape index: {}]
  %s2 = inlined_call_operand.hbm [shape: f32[8,64], index: 2, kind: input, shape index: {}]
  %s3 = inlined_call_operand.hbm [shape: f32[64,64], index: 3, kind: input, shape index: {}]
  %s4 = inlined_call_operand.vmem [shape: f32[8,64], index: 4, kind: input, shape index: {}]
  %s5 = inlined_call_operand.hbm [shape: f32[64,128], index: 5, kind: input, shape index: {}]
  %s6 = inlined_call_operand.vmem [shape: f32[8,128], index: 6, kind: input, shape index: {}]
  %s7 = inlined_call_operand.hbm [shape: f32[8,128], index: 7, kind: output, shape index: {}]
  %s8 = sld [smem:[#allocation0]]
  $region58: #{tpu_custom_call.1} parent=0
    _
  %s10 = ssub.s32 1, %s8
  %s11 = scalar_select 0, %s10, %s8
  $region1: #{tpu_custom_call.1} parent=0
    #allocation2 [shape = 'u8[4096]{0}', space=vmem, size = 0x1000, scoped, tag = 'input window, operand 0, single buffered']
    #allocation3 [shape = 's32[1]{0}', space=sflag, size = 0x4, scoped, tag = 'scoped memory for tpu_custom_call.1']
    #allocation4 [shape = 's32[1]{0}', space=sflag, size = 0x4, scoped, tag = 'scoped memory for tpu_custom_call.1']
    #allocation5 [shape = 'u8[16384]{0}', space=vmem, size = 0x4000, scoped, tag = 'input window, operand 1, single buffered']
    #allocation6 [shape = 's32[1]{0}', space=sflag, size = 0x4, scoped, tag = 'scoped memory for tpu_custom_call.1']
    #allocation7 [shape = 'u8[4096]{0}', space=vmem, size = 0x1000, scoped, tag = 'input window, operand 2, single buffered']
    #allocation8 [shape = 'u8[32768]{0}', space=vmem, size = 0x8000, scoped, tag = 'input window, operand 3, single buffered']
    #allocation9 [shape = 's32[1]{0}', space=sflag, size = 0x4, scoped, tag = 'scoped memory for tpu_custom_call.1']
    #allocation10 [shape = 'u8[32768]{0}', space=vmem, size = 0x8000, scoped, tag = 'input window, operand 5, single buffered']
    #allocation11 [shape = 'u8[4096]{0}', space=vmem, size = 0x1000, scoped, tag = 'output window, operand 0, single buffered']
    %12 = vsyncpa [#allocation3], 0
    %13 = vsyncpa [#allocation6], 0
    %14 = vsyncpa [#allocation9], 0
    %15 = vsyncpa [#allocation4], 0
    // Predicated region
    $region2: #{tpu_custom_call.1} parent=1 // pred_check
      _
    $region3: #{tpu_custom_call.1} parent=1 // pred_check_branch
      %17 = sbr.rel (0) target = $region5
    $region4: #{tpu_custom_call.1} parent=1 // pred_region
      %s19 = ssub.s32 128, 128
      %20 = vsyncadd [#allocation3], %s19
      %s22 = sshll.u32 [#allocation2], 4
      %s23 = int_to_ptr.vmem [resolvable:$true] %s22
      %25 = dma.hbm_to_vmem [thread:$0]  %s0, 128, %s23, [#allocation3]
    $region5: #{tpu_custom_call.1} parent=1 // pred_fallthru
      _
    // Predicated region
    $region6: #{tpu_custom_call.1} parent=1 // pred_check
      _
    $region7: #{tpu_custom_call.1} parent=1 // pred_check_branch
      %27 = sbr.rel (0) target = $region9
    $region8: #{tpu_custom_call.1} parent=1 // pred_region
      %s29 = ssub.s32 512, 512
      %30 = vsyncadd [#allocation6], %s29
      %s31 = sshll.u32 [#allocation5], 4
      %s32 = int_to_ptr.vmem [resolvable:$true] %s31
      %37 = dma.hbm_to_vmem [thread:$0]  %s1, 512, %s32, [#allocation6], 128, 128, 8
    $region9: #{tpu_custom_call.1} parent=1 // pred_fallthru
      _
    // Predicated region
    $region10: #{tpu_custom_call.1} parent=1 // pred_check
      _
    $region11: #{tpu_custom_call.1} parent=1 // pred_check_branch
      %39 = sbr.rel (0) target = $region13
    $region12: #{tpu_custom_call.1} parent=1 // pred_region
      %s41 = ssub.s32 128, 128
      %42 = vsyncadd [#allocation6], %s41
      %s44 = sshll.u32 [#allocation7], 4
      %s45 = int_to_ptr.vmem [resolvable:$true] %s44
      %47 = dma.hbm_to_vmem [thread:$0]  %s2, 128, %s45, [#allocation6]
    $region13: #{tpu_custom_call.1} parent=1 // pred_fallthru
      _
    // Predicated region
    $region14: #{tpu_custom_call.1} parent=1 // pred_check
      _
    $region15: #{tpu_custom_call.1} parent=1 // pred_check_branch
      %49 = sbr.rel (0) target = $region17
    $region16: #{tpu_custom_call.1} parent=1 // pred_region
      %s51 = ssub.s32 1024, 1024
      %52 = vsyncadd [#allocation9], %s51
      %s53 = sshll.u32 [#allocation8], 4
      %s54 = int_to_ptr.vmem [resolvable:$true] %s53
      %59 = dma.hbm_to_vmem [thread:$0]  %s3, 1024, %s54, [#allocation9], 128, 128, 8
    $region17: #{tpu_custom_call.1} parent=1 // pred_fallthru
      _
    // Predicated region
    $region18: #{tpu_custom_call.1} parent=1 // pred_check
      _
    $region19: #{tpu_custom_call.1} parent=1 // pred_check_branch
      %61 = sbr.rel (0) target = $region21
    $region20: #{tpu_custom_call.1} parent=1 // pred_region
      _
    $region21: #{tpu_custom_call.1} parent=1 // pred_fallthru
      _
    // Predicated region
    $region22: #{tpu_custom_call.1} parent=1 // pred_check
      _
    $region23: #{tpu_custom_call.1} parent=1 // pred_check_branch
      %63 = sbr.rel (0) target = $region25
    $region24: #{tpu_custom_call.1} parent=1 // pred_region
      %s65 = ssub.s32 1024, 1024
      %66 = vsyncadd [#allocation9], %s65
      %s67 = sshll.u32 [#allocation10], 4
      %s68 = int_to_ptr.vmem [resolvable:$true] %s67
      %73 = dma.hbm_to_vmem [thread:$0]  %s5, 1024, %s68, [#allocation9], 128, 128, 8
    $region25: #{tpu_custom_call.1} parent=1 // pred_fallthru
      _
    // Predicated region
    $region26: #{tpu_custom_call.1} parent=1 // pred_check
      _
    $region27: #{tpu_custom_call.1} parent=1 // pred_check_branch
      %75 = sbr.rel (0) target = $region29
    $region28: #{tpu_custom_call.1} parent=1 // pred_region
      _
    $region29: #{tpu_custom_call.1} parent=1 // pred_fallthru
      _
    // Predicated region
    $region30: #{tpu_custom_call.1} parent=1 // pred_check
      _
    $region31: #{tpu_custom_call.1} parent=1 // pred_check_branch
      %77 = sbr.rel (0) target = $region33
    $region32: #{tpu_custom_call.1} parent=1 // pred_region
      %78 = dma.done [#allocation3], 128
    $region33: #{tpu_custom_call.1} parent=1 // pred_fallthru
      _
    // Predicated region
    $region34: #{tpu_custom_call.1} parent=1 // pred_check
      _
    $region35: #{tpu_custom_call.1} parent=1 // pred_check_branch
      %80 = sbr.rel (0) target = $region37
    $region36: #{tpu_custom_call.1} parent=1 // pred_region
      %81 = dma.done [#allocation6], 512
    $region37: #{tpu_custom_call.1} parent=1 // pred_fallthru
      _
    // Predicated region
    $region38: #{tpu_custom_call.1} parent=1 // pred_check
      _
    $region39: #{tpu_custom_call.1} parent=1 // pred_check_branch
      %83 = sbr.rel (0) target = $region41
    $region40: #{tpu_custom_call.1} parent=1 // pred_region
      %84 = dma.done [#allocation6], 128
    $region41: #{tpu_custom_call.1} parent=1 // pred_fallthru
      _
    // Predicated region
    $region42: #{tpu_custom_call.1} parent=1 // pred_check
      _
    $region43: #{tpu_custom_call.1} parent=1 // pred_check_branch
      %86 = sbr.rel (0) target = $region45
    $region44: #{tpu_custom_call.1} parent=1 // pred_region
      %87 = dma.done [#allocation9], 1024
    $region45: #{tpu_custom_call.1} parent=1 // pred_fallthru
      _
    // Predicated region
    $region46: #{tpu_custom_call.1} parent=1 // pred_check
      _
    $region47: #{tpu_custom_call.1} parent=1 // pred_check_branch
      %89 = sbr.rel (0) target = $region49
    $region48: #{tpu_custom_call.1} parent=1 // pred_region
      %90 = dma.done [#allocation9], 1024
    $region49: #{tpu_custom_call.1} parent=1 // pred_fallthru
      _
    %v91 = vld [vmem:[#allocation2] sm:$0xff]
    %v92 = vld [vmem:[#allocation5] sm:$0xff]
    %v93 = vld [vmem:[#allocation5 + $0x8] sm:$0xff]
    %v94 = vld [vmem:[#allocation5 + $0x10] sm:$0xff]
    %v95 = vld [vmem:[#allocation5 + $0x18] sm:$0xff]
    %v96 = vld [vmem:[#allocation7] sm:$0x1]
    %v97 = vlaneseq
    %v98 = vshrl.u32 %v97, 7
    %v99 = vsub.s32 0, %v98
    %v100 = vrot.slane %v96, %v99
    %vm101 = vcmask 261120
    %v103 = vsel %vm101, %v91, 0
    %105 = vmatprep.subr.mxu0 0.0
    %106 = vmatpush1.msra.mxu0 %v92
    %107 = vmatprep.subr.mxu0 0.0
    %108 = vmatpush1.msra.mxu0 %v93
    %109 = vmatprep.subr.mxu0 0.0
    %110 = vmatpush1.msra.mxu0 %v94
    %111 = vmatprep.subr.mxu0 0.0
    %112 = vmatpush1.msra.mxu0 %v95
    %113 = vmatprep.subr.mxu0 0.0
    %114 = vmatpush1.msra.mxu0 0.0
    %115 = vmatprep.subr.mxu0 0.0
    %116 = vmatpush1.msra.mxu0 0.0
    %117 = vmatprep.subr.mxu0 0.0
    %118 = vmatpush1.msra.mxu0 0.0
    %119 = vmatprep.subr.mxu0 0.0
    %120 = vmatpush1.msra.mxu0 0.0
    %121 = vmatprep.subr.mxu0 0.0
    %122 = vmatpush1.msra.mxu0 0.0
    %123 = vmatprep.subr.mxu0 0.0
    %124 = vmatpush1.msra.mxu0 0.0
    %125 = vmatprep.subr.mxu0 0.0
    %126 = vmatpush1.msra.mxu0 0.0
    %127 = vmatprep.subr.mxu0 0.0
    %128 = vmatpush1.msra.mxu0 0.0
    %129 = vmatprep.subr.mxu0 0.0
    %130 = vmatpush1.msra.mxu0 0.0
    %131 = vmatprep.subr.mxu0 0.0
    %132 = vmatpush1.msra.mxu0 0.0
    %133 = vmatprep.subr.mxu0 0.0
    %134 = vmatpush1.msra.mxu0 0.0
    %135 = vmatprep.subr.mxu0 0.0
    %136 = vmatpush1.msra.mxu0 0.0
    %137 = vmatprep.subr.mxu0 0.0
    %138 = vmatpush1.msra.mxu0 0.0
    %139 = vmatprep.subr.mxu0 0.0
    %140 = vmatpush1.msra.mxu0 0.0
    %141 = vmatprep.subr.mxu0 0.0
    %142 = vmatpush1.msra.mxu0 0.0
    %143 = vmatprep.subr.mxu0 0.0
    %144 = vmatpush1.msra.mxu0 0.0
    %145 = vmatprep.subr.mxu0 0.0
    %146 = vmatpush1.msra.mxu0 0.0
    %147 = vmatprep.subr.mxu0 0.0
    %148 = vmatpush1.msra.mxu0 0.0
    %149 = vmatprep.subr.mxu0 0.0
    %150 = vmatpush1.msra.mxu0 0.0
    %151 = vmatprep.subr.mxu0 0.0
    %152 = vmatpush1.msra.mxu0 0.0
    %153 = vmatprep.subr.mxu0 0.0
    %154 = vmatpush1.msra.mxu0 0.0
    %155 = vmatprep.subr.mxu0 0.0
    %156 = vmatpush1.msra.mxu0 0.0
    %157 = vmatprep.subr.mxu0 0.0
    %158 = vmatpush1.msra.mxu0 0.0
    %159 = vmatprep.subr.mxu0 0.0
    %160 = vmatpush1.msra.mxu0 0.0
    %161 = vmatprep.subr.mxu0 0.0
    %162 = vmatpush1.msra.mxu0 0.0
    %163 = vmatprep.subr.mxu0 0.0
    %164 = vmatpush1.msra.mxu0 0.0
    %165 = vmatprep.subr.mxu0 0.0
    %166 = vmatpush1.msra.mxu0 0.0
    %167 = vmatprep.subr.mxu0 0.0
    %168 = vmatpush1.msra.mxu0 0.0
    %169 = vmatprep.mubr.f32.mxu0 0.0
    %170 = vmatmul.mubr.f32.gmra.mrb[0].mxu0 %v103
    %v171 = vpop.f32.mrb[0].mxu0
    %v172 = vadd.f32 %v100, %v171
    %v173 = vpop.f32.mrb[0].mxu0
    %174 = vdwg.mxu0
    %v175 = vmax.f32 %v172, 0.0
    %v176 = vld [vmem:[#allocation8] sm:$0xff]
    %v177 = vld [vmem:[#allocation8 + $0x8] sm:$0xff]
    %v178 = vld [vmem:[#allocation8 + $0x10] sm:$0xff]
    %v179 = vld [vmem:[#allocation8 + $0x18] sm:$0xff]
    %v180 = vld [vmem:[#allocation8 + $0x20] sm:$0xff]
    %v181 = vld [vmem:[#allocation8 + $0x28] sm:$0xff]
    %v182 = vld [vmem:[#allocation8 + $0x30] sm:$0xff]
    %v183 = vld [vmem:[#allocation8 + $0x38] sm:$0xff]
    %v184 = vld [vmem:[%s4] sm:$0x1]
    %v185 = vlaneseq
    %v186 = vshrl.u32 %v185, 7
    %v187 = vsub.s32 0, %v186
    %v188 = vrot.slane %v184, %v187
    %vm189 = vcmask 523264
    %v191 = vsel %vm189, %v175, 0
    %193 = vmatprep.subr.mxu0 0.0
    %194 = vmatpush1.msra.mxu0 %v176
    %195 = vmatprep.subr.mxu0 0.0
    %196 = vmatpush1.msra.mxu0 %v177
    %197 = vmatprep.subr.mxu0 0.0
    %198 = vmatpush1.msra.mxu0 %v178
    %199 = vmatprep.subr.mxu0 0.0
    %200 = vmatpush1.msra.mxu0 %v179
    %201 = vmatprep.subr.mxu0 0.0
    %202 = vmatpush1.msra.mxu0 %v180
    %203 = vmatprep.subr.mxu0 0.0
    %204 = vmatpush1.msra.mxu0 %v181
    %205 = vmatprep.subr.mxu0 0.0
    %206 = vmatpush1.msra.mxu0 %v182
    %207 = vmatprep.subr.mxu0 0.0
    %208 = vmatpush1.msra.mxu0 %v183
    %209 = vmatprep.subr.mxu0 0.0
    %210 = vmatpush1.msra.mxu0 0.0
    %211 = vmatprep.subr.mxu0 0.0
    %212 = vmatpush1.msra.mxu0 0.0
    %213 = vmatprep.subr.mxu0 0.0
    %214 = vmatpush1.msra.mxu0 0.0
    %215 = vmatprep.subr.mxu0 0.0
    %216 = vmatpush1.msra.mxu0 0.0
    %217 = vmatprep.subr.mxu0 0.0
    %218 = vmatpush1.msra.mxu0 0.0
    %219 = vmatprep.subr.mxu0 0.0
    %220 = vmatpush1.msra.mxu0 0.0
    %221 = vmatprep.subr.mxu0 0.0
    %222 = vmatpush1.msra.mxu0 0.0
    %223 = vmatprep.subr.mxu0 0.0
    %224 = vmatpush1.msra.mxu0 0.0
    %225 = vmatprep.subr.mxu0 0.0
    %226 = vmatpush1.msra.mxu0 0.0
    %227 = vmatprep.subr.mxu0 0.0
    %228 = vmatpush1.msra.mxu0 0.0
    %229 = vmatprep.subr.mxu0 0.0
    %230 = vmatpush1.msra.mxu0 0.0
    %231 = vmatprep.subr.mxu0 0.0
    %232 = vmatpush1.msra.mxu0 0.0
    %233 = vmatprep.subr.mxu0 0.0
    %234 = vmatpush1.msra.mxu0 0.0
    %235 = vmatprep.subr.mxu0 0.0
    %236 = vmatpush1.msra.mxu0 0.0
    %237 = vmatprep.subr.mxu0 0.0
    %238 = vmatpush1.msra.mxu0 0.0
    %239 = vmatprep.subr.mxu0 0.0
    %240 = vmatpush1.msra.mxu0 0.0
    %241 = vmatprep.subr.mxu0 0.0
    %242 = vmatpush1.msra.mxu0 0.0
    %243 = vmatprep.subr.mxu0 0.0
    %244 = vmatpush1.msra.mxu0 0.0
    %245 = vmatprep.subr.mxu0 0.0
    %246 = vmatpush1.msra.mxu0 0.0
    %247 = vmatprep.subr.mxu0 0.0
    %248 = vmatpush1.msra.mxu0 0.0
    %249 = vmatprep.subr.mxu0 0.0
    %250 = vmatpush1.msra.mxu0 0.0
    %251 = vmatprep.subr.mxu0 0.0
    %252 = vmatpush1.msra.mxu0 0.0
    %253 = vmatprep.subr.mxu0 0.0
    %254 = vmatpush1.msra.mxu0 0.0
    %255 = vmatprep.subr.mxu0 0.0
    %256 = vmatpush1.msra.mxu0 0.0
    %257 = vmatprep.mubr.f32.mxu0 0.0
    %258 = vmatmul.mubr.f32.gmra.mrb[0].mxu0 %v191
    %v259 = vpop.f32.mrb[0].mxu0
    %v260 = vadd.f32 %v188, %v259
    %v261 = vpop.f32.mrb[0].mxu0
    %262 = vdwg.mxu0
    %v263 = vmax.f32 %v260, 0.0
    %v264 = vld [vmem:[#allocation10] sm:$0xff]
    %v265 = vld [vmem:[#allocation10 + $0x8] sm:$0xff]
    %v266 = vld [vmem:[#allocation10 + $0x10] sm:$0xff]
    %v267 = vld [vmem:[#allocation10 + $0x18] sm:$0xff]
    %v268 = vld [vmem:[#allocation10 + $0x20] sm:$0xff]
    %v269 = vld [vmem:[#allocation10 + $0x28] sm:$0xff]
    %v270 = vld [vmem:[#allocation10 + $0x30] sm:$0xff]
    %v271 = vld [vmem:[#allocation10 + $0x38] sm:$0xff]
    %v272 = vld [vmem:[%s6] sm:$0x1]
    %v273 = vlaneseq
    %v274 = vshrl.u32 %v273, 7
    %v275 = vsub.s32 0, %v274
    %v276 = vrot.slane %v272, %v275
    %v278 = vsel %vm189, %v263, 0
    %280 = vmatprep.subr.mxu0 0.0
    %281 = vmatpush1.msra.mxu0 %v264
    %282 = vmatprep.subr.mxu0 0.0
    %283 = vmatpush1.msra.mxu0 %v265
    %284 = vmatprep.subr.mxu0 0.0
    %285 = vmatpush1.msra.mxu0 %v266
    %286 = vmatprep.subr.mxu0 0.0
    %287 = vmatpush1.msra.mxu0 %v267
    %288 = vmatprep.subr.mxu0 0.0
    %289 = vmatpush1.msra.mxu0 %v268
    %290 = vmatprep.subr.mxu0 0.0
    %291 = vmatpush1.msra.mxu0 %v269
    %292 = vmatprep.subr.mxu0 0.0
    %293 = vmatpush1.msra.mxu0 %v270
    %294 = vmatprep.subr.mxu0 0.0
    %295 = vmatpush1.msra.mxu0 %v271
    %296 = vmatprep.subr.mxu0 0.0
    %297 = vmatpush1.msra.mxu0 0.0
    %298 = vmatprep.subr.mxu0 0.0
    %299 = vmatpush1.msra.mxu0 0.0
    %300 = vmatprep.subr.mxu0 0.0
    %301 = vmatpush1.msra.mxu0 0.0
    %302 = vmatprep.subr.mxu0 0.0
    %303 = vmatpush1.msra.mxu0 0.0
    %304 = vmatprep.subr.mxu0 0.0
    %305 = vmatpush1.msra.mxu0 0.0
    %306 = vmatprep.subr.mxu0 0.0
    %307 = vmatpush1.msra.mxu0 0.0
    %308 = vmatprep.subr.mxu0 0.0
    %309 = vmatpush1.msra.mxu0 0.0
    %310 = vmatprep.subr.mxu0 0.0
    %311 = vmatpush1.msra.mxu0 0.0
    %312 = vmatprep.subr.mxu0 0.0
    %313 = vmatpush1.msra.mxu0 0.0
    %314 = vmatprep.subr.mxu0 0.0
    %315 = vmatpush1.msra.mxu0 0.0
    %316 = vmatprep.subr.mxu0 0.0
    %317 = vmatpush1.msra.mxu0 0.0
    %318 = vmatprep.subr.mxu0 0.0
    %319 = vmatpush1.msra.mxu0 0.0
    %320 = vmatprep.subr.mxu0 0.0
    %321 = vmatpush1.msra.mxu0 0.0
    %322 = vmatprep.subr.mxu0 0.0
    %323 = vmatpush1.msra.mxu0 0.0
    %324 = vmatprep.subr.mxu0 0.0
    %325 = vmatpush1.msra.mxu0 0.0
    %326 = vmatprep.subr.mxu0 0.0
    %327 = vmatpush1.msra.mxu0 0.0
    %328 = vmatprep.subr.mxu0 0.0
    %329 = vmatpush1.msra.mxu0 0.0
    %330 = vmatprep.subr.mxu0 0.0
    %331 = vmatpush1.msra.mxu0 0.0
    %332 = vmatprep.subr.mxu0 0.0
    %333 = vmatpush1.msra.mxu0 0.0
    %334 = vmatprep.subr.mxu0 0.0
    %335 = vmatpush1.msra.mxu0 0.0
    %336 = vmatprep.subr.mxu0 0.0
    %337 = vmatpush1.msra.mxu0 0.0
    %338 = vmatprep.subr.mxu0 0.0
    %339 = vmatpush1.msra.mxu0 0.0
    %340 = vmatprep.subr.mxu0 0.0
    %341 = vmatpush1.msra.mxu0 0.0
    %342 = vmatprep.subr.mxu0 0.0
    %343 = vmatpush1.msra.mxu0 0.0
    %344 = vmatprep.mubr.f32.mxu0 0.0
    %345 = vmatmul.mubr.f32.gmra.mrb[0].mxu0 %v278
    %v346 = vpop.f32.mrb[0].mxu0
    %v347 = vadd.f32 %v276, %v346
    %v348 = vpop.f32.mrb[0].mxu0
    %349 = vdwg.mxu0
    %350 = vst [vmem:[#allocation11] sm:$0xff] %v347
    // Predicated region
    $region50: #{tpu_custom_call.1} parent=1 // pred_check
      _
    $region51: #{tpu_custom_call.1} parent=1 // pred_check_branch
      %352 = sbr.rel (0) target = $region53
    $region52: #{tpu_custom_call.1} parent=1 // pred_region
      %s354 = ssub.s32 128, 128
      %355 = vsyncadd [#allocation4], %s354
      %s357 = sshll.u32 [#allocation11], 4
      %s358 = int_to_ptr.vmem [resolvable:$true] %s357
      %360 = dma.vmem_to_hbm [thread:$0]  %s358, 128, %s7, [#allocation4]
    $region53: #{tpu_custom_call.1} parent=1 // pred_fallthru
      _
    // Predicated region
    $region54: #{tpu_custom_call.1} parent=1 // pred_check
      _
    $region55: #{tpu_custom_call.1} parent=1 // pred_check_branch
      %362 = sbr.rel (0) target = $region57
    $region56: #{tpu_custom_call.1} parent=1 // pred_region
      %363 = dma.done [#allocation4], 128
    $region57: #{tpu_custom_call.1} parent=1 // pred_fallthru
      _
    %364 = vsyncpa [#allocation3], 1
    %365 = vsyncpa [#allocation6], 1
    %366 = vsyncpa [#allocation9], 1
    %367 = vsyncpa [#allocation4], 1

</llo_original>
